<compile_context>
chip_gen: v6e
topology: v6e:2x2x1
jax: 0.10.0
libtpu: 0.0.40
codegen_flags: <defaults>
</compile_context>

<pallas_src>
import functools

import jax
import jax.numpy as jnp
from jax import lax
from jax.experimental import pallas as pl
from jax.experimental.pallas import tpu as pltpu


_LANE = 128
_SUBLANE = 8


def _round_up(n, m):
    return ((n + m - 1) // m) * m


def _cdiv(a, b):
    return (a + b - 1) // b


# --------------------------------------------------------------------------- #
# Kernels
# --------------------------------------------------------------------------- #
def _single_k_kernel(x_ref, w_ref, b_ref, o_ref):
    # x_ref: (tm, D)   w_ref: (D, H)   b_ref: (1, H) f32   o_ref: (tm, H)
    acc = jnp.dot(x_ref[...], w_ref[...], preferred_element_type=jnp.float32)
    o_ref[...] = (acc + b_ref[...]).astype(o_ref.dtype)


def _multi_k_kernel(x_ref, w_ref, b_ref, o_ref, acc_ref, *, tk, tail_valid):
    # x_ref: (tm, tk)  w_ref: (tk, H)  b_ref: (1, H) f32
    # o_ref: (tm, H)   acc_ref: (tm, H) f32 (persists across the k axis)
    k = pl.program_id(1)
    last = pl.num_programs(1) - 1

    @pl.when(k == 0)
    def _():
        # Initialize the accumulator with the broadcast bias (saves the
        # finalize add).
        acc_ref[...] = jnp.zeros_like(acc_ref) + b_ref[...]

    x = x_ref[...]
    if tail_valid is not None:
        # Ragged D tail: columns >= tail_valid of the last k-block were never
        # DMA'd (stale VMEM). Zero them explicitly; the matching weight rows
        # are zero-padded in the wrapper, so 0 * 0 contributes exactly 0.
        limit = jnp.where(k == last, tail_valid, tk)
        col = lax.broadcasted_iota(jnp.int32, x.shape, 1)
        x = jnp.where(col < limit, x, jnp.zeros_like(x))

    acc_ref[...] += jnp.dot(x, w_ref[...], preferred_element_type=jnp.float32)

    @pl.when(k == last)
    def _():
        o_ref[...] = acc_ref[...].astype(o_ref.dtype)


# --------------------------------------------------------------------------- #
# Tile / VMEM budgeting
# --------------------------------------------------------------------------- #
def _vmem_budget():
    cap = 64 * 1024 * 1024  # conservative fallback = v7x per-TensorCore VMEM
    try:
        info = pltpu.get_tpu_info()
        cap = int(getattr(info, "vmem_capacity_bytes", cap)) or cap
    except Exception:
        pass
    usable = int(cap * 0.70)  # headroom for compiler-internal scratch
    return usable, cap


def _vtile_bytes(rows, cols, dtype):
    itemsize = jnp.dtype(dtype).itemsize
    pack = max(1, 4 // max(1, itemsize))
    r = _round_up(max(int(rows), 1), _SUBLANE * pack)
    c = _round_up(max(int(cols), 1), _LANE)
    return r * c * itemsize


def _estimate_vmem(tm, tk, num_k, x_dtype, out_dtype, H):
    use = 2 * _vtile_bytes(tm, tk, x_dtype)        # x stream, double-buffered
    use += 2 * _vtile_bytes(tk, H, x_dtype)        # fused weight block(s)
    use += _vtile_bytes(1, H, jnp.float32)         # bias
    use += 2 * _vtile_bytes(tm, H, out_dtype)      # output block
    if num_k > 1:
        use += _vtile_bytes(tm, H, jnp.float32)    # f32 accumulator scratch
    return use


def _k_split(D, splits):
    """Even D split: returns (tk, num_k) with tk a multiple of 128 (or tk=D)."""
    if splits <= 1:
        return D, 1
    tk = _round_up(_cdiv(D, splits), _LANE)
    num_k = _cdiv(D, tk)
    if num_k <= 1:
        return D, 1
    return tk, num_k


def _pick_tm(B, tk, num_k, sub, tm_cap, x_dtype, out_dtype, H, usable):
    if B <= sub:
        return B  # single full-extent batch block (no (8,128) constraint)
    # At least two batch blocks so the "parallel" axis can shard across v7x's
    # two TensorCores; tm stays a multiple of the sublane granule.
    tm = min(tm_cap, _round_up(_cdiv(B, 2), sub))
    while tm > sub and _estimate_vmem(tm, tk, num_k, x_dtype, out_dtype, H) > usable:
        tm = max(sub, _round_up(tm // 2, sub))
    return tm


def _select_tiles(B, D, H, x_dtype, out_dtype, tm_max, tk_max, usable):
    itemsize = jnp.dtype(x_dtype).itemsize
    sub = _SUBLANE * max(1, 4 // max(1, itemsize))  # 8 (f32) / 16 (bf16) / 32 (i8)
    tm_cap = max(sub, (int(tm_max) // sub) * sub)

    splits = max(1, _cdiv(D, max(int(tk_max), _LANE)))
    while True:
        tk, num_k = _k_split(D, splits)
        tm = _pick_tm(B, tk, num_k, sub, tm_cap, x_dtype, out_dtype, H, usable)
        est = _estimate_vmem(tm, tk, num_k, x_dtype, out_dtype, H)
        if est <= usable or tk <= _LANE:
            break
        splits += 1

    num_m = _cdiv(B, tm)
    return tm, num_m, tk, num_k, est


# --------------------------------------------------------------------------- #
# Forward wrapper
# --------------------------------------------------------------------------- #
def critic2nheads_forward(x, w_ext, b_ext, w_int, b_int, *,
                          tm_max=2048, tk_max=8192, out_dtype=jnp.float32):
    """x: (B, D); w_ext/w_int: (n_heads, D) (nn.Linear layout); b_*: (n_heads,).

    Returns (B, 2*n_heads) in `out_dtype` (f32 by default): columns
    [0:n_heads] = ext head, [n_heads:] = int head (torch.cat ordering).
    """
    B, D = x.shape
    H = w_ext.shape[0] + w_int.shape[0]
    compute_dtype = x.dtype

    # Fused, MXU-natural (D, H) weight and f32 (1, H) bias (both tiny).
    w = jnp.concatenate([w_ext, w_int], axis=0).astype(compute_dtype).T   # (D, H)
    b = jnp.concatenate([b_ext, b_int], axis=0).reshape(1, H).astype(jnp.float32)

    usable, cap = _vmem_budget()
    tm, num_m, tk, num_k, est = _select_tiles(
        B, D, H, compute_dtype, out_dtype, tm_max, tk_max, usable)
    vmem_limit = int(min(cap, max(32 * 1024 * 1024, est + 8 * 1024 * 1024)))

    itemsize = jnp.dtype(compute_dtype).itemsize
    cost = pl.CostEstimate(
        flops=2 * B * D * H,
        transcendentals=0,
        bytes_accessed=(B * D * itemsize                       # x stream (1x)
                        + num_m * D * H * itemsize             # weight re-reads
                        + B * H * jnp.dtype(out_dtype).itemsize))

    if num_k == 1:
        # Fast path: whole D in one step, no accumulator, no pl.when.
        grid = (num_m,)
        kernel = _single_k_kernel
        in_specs = [
            pl.BlockSpec((tm, D), lambda i: (i, 0)),   # x stream
            pl.BlockSpec((D, H), lambda i: (0, 0)),    # fused weight (resident)
            pl.BlockSpec((1, H), lambda i: (0, 0)),    # fused bias
        ]
        out_specs = pl.BlockSpec((tm, H), lambda i: (i, 0))
        scratch_shapes = []
        dim_sem = ("parallel",)
    else:
        d_pad = num_k * tk
        if d_pad != D:
            # Only the tiny fused weight is zero-padded; x is never copied.
            w = jnp.pad(w, ((0, d_pad - D), (0, 0)))
        tail_valid = D - (num_k - 1) * tk
        kernel = functools.partial(
            _multi_k_kernel, tk=tk,
            tail_valid=(tail_valid if tail_valid != tk else None))
        grid = (num_m, num_k)
        in_specs = [
            pl.BlockSpec((tm, tk), lambda i, k: (i, k)),
            pl.BlockSpec((tk, H), lambda i, k: (k, 0)),
            pl.BlockSpec((1, H), lambda i, k: (0, 0)),
        ]
        out_specs = pl.BlockSpec((tm, H), lambda i, k: (i, 0))
        scratch_shapes = [pltpu.VMEM((tm, H), jnp.float32)]
        dim_sem = ("parallel", "arbitrary")

    return pl.pallas_call(
        kernel,
        out_shape=jax.ShapeDtypeStruct((B, H), out_dtype),
        grid_spec=pltpu.PrefetchScalarGridSpec(
            num_scalar_prefetch=0,
            grid=grid,
            in_specs=in_specs,
            out_specs=out_specs,
            scratch_shapes=scratch_shapes,
        ),
        compiler_params=pltpu.CompilerParams(
            dimension_semantics=dim_sem,
            vmem_limit_bytes=vmem_limit,
        ),
        cost_estimate=cost,
    )(x, w, b)


# --------------------------------------------------------------------------- #
# Test harness
# --------------------------------------------------------------------------- #
def _orthogonal_rows(key, rows, cols, gain):
    """Stand-in for init_orthogonal on an (rows, cols) nn.Linear weight:
    orthonormal rows scaled by `gain` (rows <= cols)."""
    a = jax.random.normal(key, (cols, rows), dtype=jnp.float32)
    q, _ = jnp.linalg.qr(a)          # (cols, rows), orthonormal columns
    return gain * q.T                # (rows, cols), orthonormal rows


if __name__ == "__main__":
    key = jax.random.PRNGKey(0)
    k1, k2, k3 = jax.random.split(key, 3)

    # ---- Test 1: small module-consistent shapes (single-k fast path) -------
    B, D, n_heads = 8, 32, 2
    kx, ke, ki = jax.random.split(k1, 3)
    x = jax.random.normal(kx, (B, D), dtype=jnp.float32)
    w_ext = _orthogonal_rows(ke, n_heads, D, 0.01)
    b_ext = jnp.zeros((n_heads,), dtype=jnp.float32)
    w_int = _orthogonal_rows(ki, n_heads, D, 0.01)
    b_int = jnp.zeros((n_heads,), dtype=jnp.float32)

    out = jax.block_until_ready(critic2nheads_forward(x, w_ext, b_ext, w_int, b_int))
    ref = jnp.concatenate([x @ w_ext.T + b_ext, x @ w_int.T + b_int], axis=1)
    assert out.shape == (B, 2 * n_heads), out.shape
    assert jnp.allclose(out, ref, atol=1e-5), jnp.max(jnp.abs(out - ref))

    # ---- Test 2: ragged batch + ragged D (multi-k path with masked tail) ---
    B2, D2, nh2 = 50, 300, 3
    k2x, k2e, k2i = jax.random.split(k2, 3)
    x2 = jax.random.normal(k2x, (B2, D2), dtype=jnp.float32)
    w2e = _orthogonal_rows(k2e, nh2, D2, 0.01)
    b2e = 0.10 * jnp.arange(nh2, dtype=jnp.float32)
    w2i = _orthogonal_rows(k2i, nh2, D2, 0.01)
    b2i = -0.05 * jnp.arange(nh2, dtype=jnp.float32)

    out2 = jax.block_until_ready(
        critic2nheads_forward(x2, w2e, b2e, w2i, b2i, tm_max=16, tk_max=128))
    ref2 = jnp.concatenate([x2 @ w2e.T + b2e, x2 @ w2i.T + b2i], axis=1)
    assert out2.shape == (B2, 2 * nh2), out2.shape
    assert jnp.allclose(out2, ref2, atol=1e-4), jnp.max(jnp.abs(out2 - ref2))

    # ---- Test 3: bf16 activations, ragged batch, f32 output ----------------
    B3, D3, nh3 = 33, 256, 2
    k3x, k3e, k3i = jax.random.split(k3, 3)
    x3 = jax.random.normal(k3x, (B3, D3), dtype=jnp.float32).astype(jnp.bfloat16)
    w3e = _orthogonal_rows(k3e, nh3, D3, 0.01)
    b3e = 0.25 * jnp.ones((nh3,), dtype=jnp.float32)
    w3i = _orthogonal_rows(k3i, nh3, D3, 0.01)
    b3i = -0.25 * jnp.ones((nh3,), dtype=jnp.float32)

    out3 = jax.block_until_ready(critic2nheads_forward(x3, w3e, b3e, w3i, b3i))
    x3f = x3.astype(jnp.float32)
    ref3 = jnp.concatenate(
        [x3f @ w3e.astype(jnp.bfloat16).astype(jnp.float32).T + b3e,
         x3f @ w3i.astype(jnp.bfloat16).astype(jnp.float32).T + b3i], axis=1)
    assert out3.dtype == jnp.float32, out3.dtype
    assert out3.shape == (B3, 2 * nh3), out3.shape
    assert jnp.allclose(out3, ref3, atol=2e-2), jnp.max(jnp.abs(out3 - ref3))

    print("KERNEL_OK")
</pallas_src>

<mosaic_0001>
module attributes {stable_mosaic.version = 11 : i64} {
  func.func @_single_k_kernel(%arg0: i32, %arg1: memref<8x32xf32, #tpu.memory_space<vmem>>, %arg2: memref<32x4xf32, #tpu.memory_space<vmem>>, %arg3: memref<1x4xf32, #tpu.memory_space<vmem>>, %arg4: memref<8x4xf32, #tpu.memory_space<vmem>>) attributes {dimension_semantics = [#tpu.dimension_semantics<parallel>], iteration_bounds = array<i64: 1>, scalar_prefetch = 0 : i64, scratch_operands = 0 : i64, tpu.core_type = #tpu.core_type<tc>, window_params = [{transform_indices = @transform_0, window_bounds = array<i64: 8, 32>}, {pipeline_mode = #tpu.pipeline_mode<synchronous>, transform_indices = @transform_1, window_bounds = array<i64: 32, 4>}, {pipeline_mode = #tpu.pipeline_mode<synchronous>, transform_indices = @transform_2, window_bounds = array<i64: 1, 4>}, {transform_indices = @transform_3, window_bounds = array<i64: 8, 4>}]} {
    %c0 = arith.constant 0 : index
    %c0_0 = arith.constant 0 : index
    %0 = vector.load %arg1[%c0, %c0_0] : memref<8x32xf32, #tpu.memory_space<vmem>>, vector<8x32xf32>
    %c0_1 = arith.constant 0 : index
    %c0_2 = arith.constant 0 : index
    %1 = vector.load %arg2[%c0_1, %c0_2] : memref<32x4xf32, #tpu.memory_space<vmem>>, vector<32x4xf32>
    %cst = arith.constant dense<0.000000e+00> : vector<8x4xf32>
    %2 = tpu.matmul %0, %1, %cst {dimension_numbers = #tpu.dot_dimension_numbers<[1], [0], [0], [1], [0, 0, 1, 1], [], []>} : vector<8x32xf32>, vector<32x4xf32>, vector<8x4xf32> -> vector<8x4xf32>
    %c0_3 = arith.constant 0 : index
    %c0_4 = arith.constant 0 : index
    %3 = vector.load %arg3[%c0_3, %c0_4] : memref<1x4xf32, #tpu.memory_space<vmem>>, vector<1x4xf32>
    %4 = vector.broadcast %3 : vector<1x4xf32> to vector<8x4xf32>
    %5 = arith.addf %2, %4 : vector<8x4xf32>
    %c0_5 = arith.constant 0 : index
    %c0_6 = arith.constant 0 : index
    %6 = vector.load %arg4[%c0_5, %c0_6] : memref<8x4xf32, #tpu.memory_space<vmem>>, vector<8x4xf32>
    tpu.vector_store %arg4[%c0_5, %c0_6], %5 {strides = array<i32>} : memref<8x4xf32, #tpu.memory_space<vmem>>, vector<8x4xf32>,
    return
  }
  func.func @transform_0(%arg0: i32) -> (i32, i32) {
    %c0_i32 = arith.constant 0 : i32
    %c0_i32_0 = arith.constant 0 : i32
    return %arg0, %c0_i32 : i32, i32
  }
  func.func @transform_1(%arg0: i32) -> (i32, i32) {
    %c0_i32 = arith.constant 0 : i32
    %c0_i32_0 = arith.constant 0 : i32
    %c0_i32_1 = arith.constant 0 : i32
    return %c0_i32, %c0_i32_0 : i32, i32
  }
  func.func @transform_2(%arg0: i32) -> (i32, i32) {
    %c0_i32 = arith.constant 0 : i32
    %c0_i32_0 = arith.constant 0 : i32
    %c0_i32_1 = arith.constant 0 : i32
    return %c0_i32, %c0_i32_0 : i32, i32
  }
  func.func @transform_3(%arg0: i32) -> (i32, i32) {
    %c0_i32 = arith.constant 0 : i32
    %c0_i32_0 = arith.constant 0 : i32
    return %arg0, %c0_i32 : i32, i32
  }
}

</mosaic_0001>

<llo_original>
// kernel: tpu_custom_call.1
$region0: #{tpu_custom_call.1}
  #allocation0 [shape = 'u32[]', space=smem, size = 0x4, offset = 0x4, fixed_abs, tag = 'smem constant byte address 0x4 - core index']
  #allocation1 [shape = 'u32[144,128]{1,0:T(1,128)}', space=vmem, size = 0x12000, scoped, tag = 'internal scratch']
  %s0 = inlined_call_operand.vmem [shape: f32[8,32], index: 0, kind: input, shape index: {}]
  %s1 = inlined_call_operand.vmem [shape: f32[32,4], index: 1, kind: input, shape index: {}]
  %s2 = inlined_call_operand.vmem [shape: f32[1,4], index: 2, kind: input, shape index: {}]
  %s3 = inlined_call_operand.vmem [shape: f32[8,4], index: 3, kind: output, shape index: {}]
  %s4 = sld [smem:[#allocation0]]
  $region22: #{tpu_custom_call.1} parent=0
    _
  %s6 = ssub.s32 1, %s4
  %s7 = scalar_select 0, %s6, %s4
  // Predicated region
  $region2: #{tpu_custom_call.1} parent=0 // pred_check
    _
  $region3: #{tpu_custom_call.1} parent=0 // pred_check_branch
    %9 = sbr.rel (0) target = $region5
  $region4: #{tpu_custom_call.1} parent=0 // pred_region
    _
  $region5: #{tpu_custom_call.1} parent=0 // pred_fallthru
    _
  // Predicated region
  $region6: #{tpu_custom_call.1} parent=0 // pred_check
    _
  $region7: #{tpu_custom_call.1} parent=0 // pred_check_branch
    %11 = sbr.rel (0) target = $region9
  $region8: #{tpu_custom_call.1} parent=0 // pred_region
    _
  $region9: #{tpu_custom_call.1} parent=0 // pred_fallthru
    _
  // Predicated region
  $region10: #{tpu_custom_call.1} parent=0 // pred_check
    _
  $region11: #{tpu_custom_call.1} parent=0 // pred_check_branch
    %13 = sbr.rel (0) target = $region13
  $region12: #{tpu_custom_call.1} parent=0 // pred_region
    _
  $region13: #{tpu_custom_call.1} parent=0 // pred_fallthru
    _
  %v14 = vld [vmem:[%s0] sm:$0xff]
  %v15 = vld [vmem:[%s1] sm:$0xff]
  %v16 = vld [vmem:[%s1 + $0x8] sm:$0xff]
  %v17 = vld [vmem:[%s1 + $0x10] sm:$0xff]
  %v18 = vld [vmem:[%s1 + $0x18] sm:$0xff]
  %v19 = vld [vmem:[%s2] sm:$0x1]
  %v21 = vlaneseq
  %v22 = vshrl.u32 %v21, 7
  %v23 = vsub.s32 0, %v22
  %v24 = vrot.slane %v19, %v23
  %vm26 = vcmask 261120
  %v28 = vsel %vm26, %v14, 0
  %30 = vmatprep.subr.mxu0 0.0
  %31 = vmatpush1.msra.mxu0 0.0
  %32 = vmatprep.subr.mxu0 0.0
  %33 = vmatpush1.msra.mxu0 0.0
  %34 = vmatprep.subr.mxu0 0.0
  %35 = vmatpush1.msra.mxu0 0.0
  %36 = vmatprep.subr.mxu0 0.0
  %37 = vmatpush1.msra.mxu0 0.0
  %38 = vmatprep.subr.mxu0 0.0
  %39 = vmatpush1.msra.mxu0 0.0
  %40 = vmatprep.subr.mxu0 0.0
  %41 = vmatpush1.msra.mxu0 0.0
  %42 = vmatprep.subr.mxu0 0.0
  %43 = vmatpush1.msra.mxu0 0.0
  %44 = vmatprep.subr.mxu0 0.0
  %45 = vmatpush1.msra.mxu0 0.0
  %46 = vmatprep.subr.mxu0 0.0
  %47 = vmatpush1.msra.mxu0 0.0
  %48 = vmatprep.subr.mxu0 0.0
  %49 = vmatpush1.msra.mxu0 0.0
  %50 = vmatprep.subr.mxu0 0.0
  %51 = vmatpush1.msra.mxu0 0.0
  %52 = vmatprep.subr.mxu0 0.0
  %53 = vmatpush1.msra.mxu0 0.0
  %54 = vmatprep.subr.mxu0 0.0
  %55 = vmatpush1.msra.mxu0 %v18
  %56 = vmatprep.subr.mxu0 0.0
  %57 = vmatpush1.msra.mxu0 %v17
  %58 = vmatprep.subr.mxu0 0.0
  %59 = vmatpush1.msra.mxu0 %v16
  %60 = vmatprep.subr.mxu0 0.0
  %61 = vmatpush1.msra.mxu0 %v15
  %62 = vmatprep.subr.mxu0 0.0
  %63 = vmatpush2.msra.mxu0 0.0
  %64 = vmatprep.subr.mxu0 0.0
  %65 = vmatpush2.msra.mxu0 0.0
  %66 = vmatprep.subr.mxu0 0.0
  %67 = vmatpush2.msra.mxu0 0.0
  %68 = vmatprep.subr.mxu0 0.0
  %69 = vmatpush2.msra.mxu0 0.0
  %70 = vmatprep.subr.mxu0 0.0
  %71 = vmatpush2.msra.mxu0 0.0
  %72 = vmatprep.subr.mxu0 0.0
  %73 = vmatpush2.msra.mxu0 0.0
  %74 = vmatprep.subr.mxu0 0.0
  %75 = vmatpush2.msra.mxu0 0.0
  %76 = vmatprep.subr.mxu0 0.0
  %77 = vmatpush2.msra.mxu0 0.0
  %78 = vmatprep.subr.mxu0 0.0
  %79 = vmatpush2.msra.mxu0 0.0
  %80 = vmatprep.subr.mxu0 0.0
  %81 = vmatpush2.msra.mxu0 0.0
  %82 = vmatprep.subr.mxu0 0.0
  %83 = vmatpush2.msra.mxu0 0.0
  %84 = vmatprep.subr.mxu0 0.0
  %85 = vmatpush2.msra.mxu0 0.0
  %86 = vmatprep.subr.mxu0 0.0
  %87 = vmatpush2.msra.mxu0 0.0
  %88 = vmatprep.subr.mxu0 0.0
  %89 = vmatpush2.msra.mxu0 0.0
  %90 = vmatprep.subr.mxu0 0.0
  %91 = vmatpush2.msra.mxu0 0.0
  %92 = vmatprep.subr.mxu0 0.0
  %93 = vmatpush2.msra.mxu0 0.0
  %94 = vmatprep.mubr.f32.mxu0 0.0
  %95 = vmatmul.mubr.f32.gmra.mxu0 %v28
  %v96 = vpop.f32.mrf.mxu0
  %v97 = vadd.f32 %v24, %v96
  %v98 = vpop.f32.mrf.mxu0
  %99 = vdwg.mxu0
  %vm100 = vcmask 31744
  %101 = vst.msk [vmem:[%s3] sm:$0xff] %vm100, %v97
  // Predicated region
  $region14: #{tpu_custom_call.1} parent=0 // pred_check
    _
  $region15: #{tpu_custom_call.1} parent=0 // pred_check_branch
    %103 = sbr.rel (0) target = $region17
  $region16: #{tpu_custom_call.1} parent=0 // pred_region
    _
  $region17: #{tpu_custom_call.1} parent=0 // pred_fallthru
    _
  // Predicated region
  $region18: #{tpu_custom_call.1} parent=0 // pred_check
    _
  $region19: #{tpu_custom_call.1} parent=0 // pred_check_branch
    %105 = sbr.rel (0) target = $region21
  $region20: #{tpu_custom_call.1} parent=0 // pred_region
    _
  $region21: #{tpu_custom_call.1} parent=0 // pred_fallthru
    _

</llo_original>
